<compile_context>
chip_gen: v5e
topology: v5e:2x2
jax: 0.10.0
libtpu: 0.0.40
codegen_flags: <defaults>
</compile_context>

<pallas_src>
import functools

import jax
import jax.numpy as jnp
from jax.experimental import pallas as pl
from jax.experimental.pallas import tpu as pltpu

_LANE = 128


def _cdiv(a, b):
    return (a + b - 1) // b


def _round_up(x, m):
    return _cdiv(x, m) * m


# --------------------------------------------------------------------------
# Kernel
# --------------------------------------------------------------------------
def vae_kernel(
    x_ref, eps_ref,
    # encoder params (torch layout [out, in]; biases as [out, 1] columns)
    w_e1_ref, b_e1_ref, w_heads_ref, b_heads_ref,
    # decoder params
    w_d1_ref, b_d1_ref, w_dmu_ref, b_dmu_ref,
    # packed output slab: rows [0, n_in) = x_hat, rows [n_in, n_in+2L) = [mu|logvar]
    out_ref,
    *, n_in, n_latent, compute_dtype,
):
    # All activations are feature-major [features, batch_tile]; the batch tile
    # sits on lanes, so every load/store below is unmasked and lane-dense.
    x = x_ref[...]                                           # [n_in, tn]

    # ---- Encoder hidden layer: ReLU(W1 @ x + b1)  (f32 MXU accumulate) ----
    h = jnp.dot(w_e1_ref[...], x,
                preferred_element_type=jnp.float32) + b_e1_ref[...]
    h = jnp.maximum(h, 0.0)

    # ---- Fused encoder heads: [mu ; logvar] = Wheads @ h + bheads ----
    # (mu has no bias in the reference module; its bias half is zero.)
    heads = jnp.dot(w_heads_ref[...], h.astype(compute_dtype),
                    preferred_element_type=jnp.float32) + b_heads_ref[...]
    mu = heads[:n_latent, :]
    logvar = heads[n_latent:, :]

    # ---- Reparameterize: std = exp(0.5*logvar); z = eps*std + mu ----
    # (eps ~ Uniform[0,1) matches torch.rand_like in the reference module.)
    std = jnp.exp(0.5 * logvar)
    z = eps_ref[...] * std + mu

    # ---- Decoder hidden layer: ReLU(Wd1 @ z + bd1) ----
    hd = jnp.dot(w_d1_ref[...], z.astype(compute_dtype),
                 preferred_element_type=jnp.float32) + b_d1_ref[...]
    hd = jnp.maximum(hd, 0.0)

    # ---- Decoder head + sigmoid via tanh: sigmoid(t) = 0.5*tanh(0.5*t)+0.5 ----
    # (single EUP transcendental, no approx-reciprocal error)
    logits = jnp.dot(w_dmu_ref[...], hd.astype(compute_dtype),
                     preferred_element_type=jnp.float32) + b_dmu_ref[...]
    x_hat = 0.5 * jnp.tanh(0.5 * logits) + 0.5

    # ---- Packed lane-dense output slab (sublane-aligned static slices) ----
    out_ref[:n_in, :] = x_hat.astype(out_ref.dtype)
    out_ref[n_in:, :] = heads.astype(out_ref.dtype)


# --------------------------------------------------------------------------
# Tile selection
# --------------------------------------------------------------------------
def _select_tile_n(n, requested):
    """Pick the lane-dim (batch) tile.

    - multiple of 128 lanes (unmasked stores), or the full batch if small;
    - large (fewer ~0.35 us per-grid-step overheads);
    - >= 2 grid steps for large N so 'parallel' can use both v7x TensorCores
      (harmless on single-TC v5e/v6e).
    """
    requested = max(_LANE, (int(requested) // _LANE) * _LANE)
    if n < 2 * _LANE:
        return n                         # single block; lane dim == full array dim
    half = _round_up(_cdiv(n, 2), _LANE)  # keep the grid at >= 2 steps
    return min(requested, half)


def _fit_tile_to_vmem(tile, n_in, n_latent, hidden, in_itemsize, weight_bytes,
                      budget_bytes=20 << 20):
    """Shrink the batch tile until the per-step VMEM footprint fits the budget.

    Budget is conservative vs. the 32 MiB scoped default (and v7x's 64 MiB
    physical VMEM), so no vmem_limit_bytes override is needed.
    """
    c_out = n_in + 2 * n_latent

    def est(t):
        # double-buffered pipelined activation/output blocks
        io = 2 * t * (n_in * in_itemsize + n_latent * 4 + c_out * 4)
        # in-kernel f32 temporaries (h, heads, z, hd, logits, x_hat) -- rough bound
        act = t * (2 * hidden + 4 * n_latent + 2 * n_in + c_out) * 4
        return io + act + weight_bytes

    while tile > _LANE and est(tile) > budget_bytes:
        tile = max(_LANE, (tile // 2 // _LANE) * _LANE)
    return tile


# --------------------------------------------------------------------------
# Wrapper
# --------------------------------------------------------------------------
def vae_forward(x, eps, params, *, tile_n=2048, compute_dtype=jnp.float32):
    """Run the VAE forward pass as one batch-tiled Pallas kernel.

    Args:
      x:   [N, n_in] float32 inputs.
      eps: [N, n_latent] float32 uniform noise (matches torch.rand_like).
      params: dict of torch-layout weights/biases (see init_params).
      tile_n: requested batch tile (rows per grid step); rounded to a multiple
        of 128 lanes and auto-shrunk to fit VMEM.
      compute_dtype: MXU operand dtype.  Use jnp.bfloat16 on v6e/v7x to halve
        x/weight HBM bytes; keep jnp.float32 on v5e (no bf16 VPU path there).
        Accumulation and all elementwise math stay float32 either way.
    Returns:
      (x_hat [N, n_in], mu [N, n_latent], logvar [N, n_latent]) float32.
    """
    n, n_in = x.shape
    n_latent = params["mu_w"].shape[0]
    hidden = params["enc_w1"].shape[0]
    c_out = n_in + 2 * n_latent
    cdt = jnp.dtype(compute_dtype)

    # Fuse the two encoder heads: one [2L, hidden] weight, zero bias for the
    # bias-free mu half.  Free layout plumbing outside the kernel.
    w_heads = jnp.concatenate([params["mu_w"], params["lv_w"]], axis=0)
    b_heads = jnp.concatenate(
        [jnp.zeros((n_latent,), jnp.float32), params["lv_b"]], axis=0)

    # Feature-major activations: batch on lanes.  Cast x (and weights) to the
    # compute dtype ONCE here; eps and biases stay f32 (tiny, and they feed
    # f32 elementwise math only).
    x_fm = x.T.astype(cdt)                       # [n_in, N]
    eps_fm = eps.T.astype(jnp.float32)           # [n_latent, N]

    def wcast(w):
        return w.astype(cdt)

    def bcol(b):
        return b.reshape(-1, 1).astype(jnp.float32)   # [out, 1] column

    weight_args = (
        wcast(params["enc_w1"]), bcol(params["enc_b1"]),
        wcast(w_heads), bcol(b_heads),
        wcast(params["dec_w1"]), bcol(params["dec_b1"]),
        wcast(params["dmu_w"]), bcol(params["dmu_b"]),
    )
    weight_bytes = sum(int(w.size) * w.dtype.itemsize for w in weight_args)

    tn = _select_tile_n(n, tile_n)
    tn = _fit_tile_to_vmem(tn, n_in, n_latent, hidden,
                           x_fm.dtype.itemsize, weight_bytes)
    grid = (pl.cdiv(n, tn),)

    batch_map = lambda i: (0, i)   # activations / output: tiled along lanes (batch)
    const_map = lambda i: (0, 0)   # weights: DMA'd once, VMEM-resident

    # Advisory cost estimate for XLA's scheduler.
    flops = 2 * n * (n_in * hidden + hidden * 2 * n_latent
                     + n_latent * hidden + hidden * n_in)
    transcendentals = n * (n_latent + n_in)              # exp(std) + tanh(sigmoid)
    bytes_accessed = (int(x_fm.size) * x_fm.dtype.itemsize
                      + int(eps_fm.size) * 4
                      + weight_bytes
                      + c_out * n * 4)

    def _build_and_run(single_buffer_weights):
        if single_buffer_weights:
            # Weights never change across grid steps -> single-buffer them.
            w_specs = [pl.BlockSpec(w.shape, const_map,
                                    pipeline_mode=pl.Buffered(1))
                       for w in weight_args]
        else:
            w_specs = [pl.BlockSpec(w.shape, const_map) for w in weight_args]
        in_specs = [
            pl.BlockSpec((n_in, tn), batch_map),      # x (feature-major)
            pl.BlockSpec((n_latent, tn), batch_map),  # eps (feature-major)
        ] + w_specs
        fn = pl.pallas_call(
            functools.partial(vae_kernel, n_in=n_in, n_latent=n_latent,
                              compute_dtype=cdt),
            grid=grid,
            in_specs=in_specs,
            out_specs=pl.BlockSpec((c_out, tn), batch_map),
            out_shape=jax.ShapeDtypeStruct((c_out, n), jnp.float32),
            compiler_params=pltpu.CompilerParams(
                # Batch tiles are independent -> shard across v7x's 2 TCs.
                dimension_semantics=("parallel",),
            ),
            cost_estimate=pl.CostEstimate(
                flops=int(flops),
                transcendentals=int(transcendentals),
                bytes_accessed=int(bytes_accessed),
            ),
        )
        return fn(x_fm, eps_fm, *weight_args)

    try:
        packed = _build_and_run(True)
    except Exception:  # pipeline_mode=pl.Buffered(1) unsupported on this build
        packed = _build_and_run(False)

    # Split the packed slab and return batch-major tensors (layout plumbing).
    x_hat = packed[:n_in, :].T
    mu = packed[n_in:n_in + n_latent, :].T
    logvar = packed[n_in + n_latent:, :].T
    return x_hat, mu, logvar


# --------------------------------------------------------------------------
# Parameters & pure-JAX reference
# --------------------------------------------------------------------------
def init_params(key, n_in, n_latent, hidden):
    """Deterministic synthetic parameters in torch layout (weight: [out, in])."""
    ks = jax.random.split(key, 9)
    s = 0.1
    return {
        # Encoder: Linear(n_in -> hidden); mu: Linear(hidden -> latent, bias=False);
        #          logvar: Linear(hidden -> latent)
        "enc_w1": s * jax.random.normal(ks[0], (hidden, n_in), jnp.float32),
        "enc_b1": s * jax.random.normal(ks[1], (hidden,), jnp.float32),
        "mu_w":   s * jax.random.normal(ks[2], (n_latent, hidden), jnp.float32),
        "lv_w":   s * jax.random.normal(ks[3], (n_latent, hidden), jnp.float32),
        "lv_b":   s * jax.random.normal(ks[4], (n_latent,), jnp.float32),
        # Decoder: Linear(latent -> hidden); mu: Linear(hidden -> n_in)
        "dec_w1": s * jax.random.normal(ks[5], (hidden, n_latent), jnp.float32),
        "dec_b1": s * jax.random.normal(ks[6], (hidden,), jnp.float32),
        "dmu_w":  s * jax.random.normal(ks[7], (n_in, hidden), jnp.float32),
        "dmu_b":  s * jax.random.normal(ks[8], (n_in,), jnp.float32),
    }


def reference_forward(x, eps, p):
    """Pure-JAX reference (same math as the PyTorch module)."""
    h = jnp.maximum(x @ p["enc_w1"].T + p["enc_b1"], 0.0)
    mu = h @ p["mu_w"].T
    logvar = h @ p["lv_w"].T + p["lv_b"]
    std = jnp.exp(0.5 * logvar)
    z = eps * std + mu
    hd = jnp.maximum(z @ p["dec_w1"].T + p["dec_b1"], 0.0)
    x_hat = jax.nn.sigmoid(hd @ p["dmu_w"].T + p["dmu_b"])
    return x_hat, mu, logvar


# --------------------------------------------------------------------------
# Self-test
# --------------------------------------------------------------------------
if __name__ == "__main__":
    # Small shapes consistent with VAE(n_in=32, n_latent=8, hidden_dims=(16,))
    N, N_IN, N_LATENT, HIDDEN = 8, 32, 8, 16

    key = jax.random.PRNGKey(0)
    k_x, k_eps, k_p = jax.random.split(key, 3)

    x = jax.random.normal(k_x, (N, N_IN), jnp.float32)
    eps = jax.random.uniform(k_eps, (N, N_LATENT), jnp.float32)  # torch.rand_like
    params = init_params(k_p, N_IN, N_LATENT, HIDDEN)

    # ---- small-batch f32 check (single grid step, lane dim == full batch) ----
    x_hat, mu, logvar = vae_forward(x, eps, params)
    jax.block_until_ready((x_hat, mu, logvar))
    x_hat_r, mu_r, logvar_r = reference_forward(x, eps, params)
    assert jnp.allclose(mu, mu_r, atol=1e-5), "mu mismatch"
    assert jnp.allclose(logvar, logvar_r, atol=1e-5), "logvar mismatch"
    assert jnp.allclose(x_hat, x_hat_r, atol=1e-3), "x_hat mismatch"

    # ---- larger batch: multi-step grid (>=2 steps -> both v7x TCs usable) ----
    NB = 1024
    xb = jax.random.normal(k_x, (NB, N_IN), jnp.float32)
    epsb = jax.random.uniform(k_eps, (NB, N_LATENT), jnp.float32)
    xb_hat, mub, logvarb = vae_forward(xb, epsb, params)
    jax.block_until_ready((xb_hat, mub, logvarb))
    xb_hat_r, mub_r, logvarb_r = reference_forward(xb, epsb, params)
    assert jnp.allclose(mub, mub_r, atol=1e-5), "batched mu mismatch"
    assert jnp.allclose(logvarb, logvarb_r, atol=1e-5), "batched logvar mismatch"
    assert jnp.allclose(xb_hat, xb_hat_r, atol=1e-3), "batched x_hat mismatch"

    # ---- bf16 MXU-operand path (use on v6e/v7x; keep f32 on v5e) ----
    xbf_hat, mubf, logvarbf = vae_forward(xb, epsb, params,
                                          compute_dtype=jnp.bfloat16)
    jax.block_until_ready((xbf_hat, mubf, logvarbf))
    assert jnp.allclose(mubf, mub_r, atol=5e-2), "bf16 mu mismatch"
    assert jnp.allclose(logvarbf, logvarb_r, atol=5e-2), "bf16 logvar mismatch"
    assert jnp.allclose(xbf_hat, xb_hat_r, atol=5e-2), "bf16 x_hat mismatch"

    print("KERNEL_OK")
</pallas_src>

<mosaic_0001>
module attributes {stable_mosaic.version = 11 : i64} {
  func.func @vae_kernel(%arg0: i32, %arg1: memref<32x8xf32, #tpu.memory_space<vmem>>, %arg2: memref<8x8xf32, #tpu.memory_space<vmem>>, %arg3: memref<16x32xf32, #tpu.memory_space<vmem>>, %arg4: memref<16x1xf32, #tpu.memory_space<vmem>>, %arg5: memref<16x16xf32, #tpu.memory_space<vmem>>, %arg6: memref<16x1xf32, #tpu.memory_space<vmem>>, %arg7: memref<16x8xf32, #tpu.memory_space<vmem>>, %arg8: memref<16x1xf32, #tpu.memory_space<vmem>>, %arg9: memref<32x16xf32, #tpu.memory_space<vmem>>, %arg10: memref<32x1xf32, #tpu.memory_space<vmem>>, %arg11: memref<48x8xf32, #tpu.memory_space<vmem>>) attributes {dimension_semantics = [#tpu.dimension_semantics<parallel>], iteration_bounds = array<i64: 1>, scalar_prefetch = 0 : i64, scratch_operands = 0 : i64, tpu.core_type = #tpu.core_type<tc>, window_params = [{transform_indices = @transform_0, window_bounds = array<i64: 32, 8>}, {transform_indices = @transform_1, window_bounds = array<i64: 8, 8>}, {pipeline_mode = #tpu.pipeline_mode<synchronous>, transform_indices = @transform_2, window_bounds = array<i64: 16, 32>}, {pipeline_mode = #tpu.pipeline_mode<synchronous>, transform_indices = @transform_3, window_bounds = array<i64: 16, 1>}, {pipeline_mode = #tpu.pipeline_mode<synchronous>, transform_indices = @transform_4, window_bounds = array<i64: 16, 16>}, {pipeline_mode = #tpu.pipeline_mode<synchronous>, transform_indices = @transform_5, window_bounds = array<i64: 16, 1>}, {pipeline_mode = #tpu.pipeline_mode<synchronous>, transform_indices = @transform_6, window_bounds = array<i64: 16, 8>}, {pipeline_mode = #tpu.pipeline_mode<synchronous>, transform_indices = @transform_7, window_bounds = array<i64: 16, 1>}, {pipeline_mode = #tpu.pipeline_mode<synchronous>, transform_indices = @transform_8, window_bounds = array<i64: 32, 16>}, {pipeline_mode = #tpu.pipeline_mode<synchronous>, transform_indices = @transform_9, window_bounds = array<i64: 32, 1>}, {transform_indices = @transform_10, window_bounds = array<i64: 48, 8>}]} {
    %c0 = arith.constant 0 : index
    %c0_0 = arith.constant 0 : index
    %0 = vector.load %arg1[%c0, %c0_0] : memref<32x8xf32, #tpu.memory_space<vmem>>, vector<32x8xf32>
    %c0_1 = arith.constant 0 : index
    %c0_2 = arith.constant 0 : index
    %1 = vector.load %arg3[%c0_1, %c0_2] : memref<16x32xf32, #tpu.memory_space<vmem>>, vector<16x32xf32>
    %cst = arith.constant dense<0.000000e+00> : vector<16x8xf32>
    %2 = tpu.matmul %1, %0, %cst {dimension_numbers = #tpu.dot_dimension_numbers<[1], [0], [0], [1], [0, 0, 1, 1], [], []>} : vector<16x32xf32>, vector<32x8xf32>, vector<16x8xf32> -> vector<16x8xf32>
    %c0_3 = arith.constant 0 : index
    %c0_4 = arith.constant 0 : index
    %3 = vector.load %arg4[%c0_3, %c0_4] : memref<16x1xf32, #tpu.memory_space<vmem>>, vector<16x1xf32>
    %4 = vector.broadcast %3 : vector<16x1xf32> to vector<16x8xf32>
    %5 = arith.addf %2, %4 : vector<16x8xf32>
    %cst_5 = arith.constant 0.000000e+00 : f32
    %6 = vector.broadcast %cst_5 : f32 to vector<16x8xf32>
    %7 = arith.maximumf %5, %6 : vector<16x8xf32>
    %c0_6 = arith.constant 0 : index
    %c0_7 = arith.constant 0 : index
    %8 = vector.load %arg5[%c0_6, %c0_7] : memref<16x16xf32, #tpu.memory_space<vmem>>, vector<16x16xf32>
    %cst_8 = arith.constant dense<0.000000e+00> : vector<16x8xf32>
    %9 = tpu.matmul %8, %7, %cst_8 {dimension_numbers = #tpu.dot_dimension_numbers<[1], [0], [0], [1], [0, 0, 1, 1], [], []>} : vector<16x16xf32>, vector<16x8xf32>, vector<16x8xf32> -> vector<16x8xf32>
    %c0_9 = arith.constant 0 : index
    %c0_10 = arith.constant 0 : index
    %10 = vector.load %arg6[%c0_9, %c0_10] : memref<16x1xf32, #tpu.memory_space<vmem>>, vector<16x1xf32>
    %11 = vector.broadcast %10 : vector<16x1xf32> to vector<16x8xf32>
    %12 = arith.addf %9, %11 : vector<16x8xf32>
    %13 = vector.extract_strided_slice %12 {offsets = [0, 0], sizes = [8, 8], strides = [1, 1]} : vector<16x8xf32> to vector<8x8xf32>
    %14 = vector.extract_strided_slice %12 {offsets = [8, 0], sizes = [8, 8], strides = [1, 1]} : vector<16x8xf32> to vector<8x8xf32>
    %cst_11 = arith.constant 5.000000e-01 : f32
    %15 = vector.broadcast %cst_11 : f32 to vector<8x8xf32>
    %16 = arith.mulf %15, %14 : vector<8x8xf32>
    %17 = math.exp %16 : vector<8x8xf32>
    %c0_12 = arith.constant 0 : index
    %c0_13 = arith.constant 0 : index
    %18 = vector.load %arg2[%c0_12, %c0_13] : memref<8x8xf32, #tpu.memory_space<vmem>>, vector<8x8xf32>
    %19 = arith.mulf %18, %17 : vector<8x8xf32>
    %20 = arith.addf %19, %13 : vector<8x8xf32>
    %c0_14 = arith.constant 0 : index
    %c0_15 = arith.constant 0 : index
    %21 = vector.load %arg7[%c0_14, %c0_15] : memref<16x8xf32, #tpu.memory_space<vmem>>, vector<16x8xf32>
    %cst_16 = arith.constant dense<0.000000e+00> : vector<16x8xf32>
    %22 = tpu.matmul %21, %20, %cst_16 {dimension_numbers = #tpu.dot_dimension_numbers<[1], [0], [0], [1], [0, 0, 1, 1], [], []>} : vector<16x8xf32>, vector<8x8xf32>, vector<16x8xf32> -> vector<16x8xf32>
    %c0_17 = arith.constant 0 : index
    %c0_18 = arith.constant 0 : index
    %23 = vector.load %arg8[%c0_17, %c0_18] : memref<16x1xf32, #tpu.memory_space<vmem>>, vector<16x1xf32>
    %24 = vector.broadcast %23 : vector<16x1xf32> to vector<16x8xf32>
    %25 = arith.addf %22, %24 : vector<16x8xf32>
    %cst_19 = arith.constant 0.000000e+00 : f32
    %26 = vector.broadcast %cst_19 : f32 to vector<16x8xf32>
    %27 = arith.maximumf %25, %26 : vector<16x8xf32>
    %c0_20 = arith.constant 0 : index
    %c0_21 = arith.constant 0 : index
    %28 = vector.load %arg9[%c0_20, %c0_21] : memref<32x16xf32, #tpu.memory_space<vmem>>, vector<32x16xf32>
    %cst_22 = arith.constant dense<0.000000e+00> : vector<32x8xf32>
    %29 = tpu.matmul %28, %27, %cst_22 {dimension_numbers = #tpu.dot_dimension_numbers<[1], [0], [0], [1], [0, 0, 1, 1], [], []>} : vector<32x16xf32>, vector<16x8xf32>, vector<32x8xf32> -> vector<32x8xf32>
    %c0_23 = arith.constant 0 : index
    %c0_24 = arith.constant 0 : index
    %30 = vector.load %arg10[%c0_23, %c0_24] : memref<32x1xf32, #tpu.memory_space<vmem>>, vector<32x1xf32>
    %31 = vector.broadcast %30 : vector<32x1xf32> to vector<32x8xf32>
    %32 = arith.addf %29, %31 : vector<32x8xf32>
    %cst_25 = arith.constant 5.000000e-01 : f32
    %33 = vector.broadcast %cst_25 : f32 to vector<32x8xf32>
    %34 = arith.mulf %33, %32 : vector<32x8xf32>
    %35 = math.tanh %34 : vector<32x8xf32>
    %cst_26 = arith.constant 5.000000e-01 : f32
    %36 = vector.broadcast %cst_26 : f32 to vector<32x8xf32>
    %37 = arith.mulf %36, %35 : vector<32x8xf32>
    %cst_27 = arith.constant 5.000000e-01 : f32
    %38 = vector.broadcast %cst_27 : f32 to vector<32x8xf32>
    %39 = arith.addf %37, %38 : vector<32x8xf32>
    %c0_28 = arith.constant 0 : index
    %c0_29 = arith.constant 0 : index
    %40 = vector.load %arg11[%c0_28, %c0_29] : memref<48x8xf32, #tpu.memory_space<vmem>>, vector<32x8xf32>
    tpu.vector_store %arg11[%c0_28, %c0_29], %39 {strides = array<i32>} : memref<48x8xf32, #tpu.memory_space<vmem>>, vector<32x8xf32>,
    %c32 = arith.constant 32 : index
    %c0_30 = arith.constant 0 : index
    %41 = vector.load %arg11[%c32, %c0_30] : memref<48x8xf32, #tpu.memory_space<vmem>>, vector<16x8xf32>
    tpu.vector_store %arg11[%c32, %c0_30], %12 {strides = array<i32>} : memref<48x8xf32, #tpu.memory_space<vmem>>, vector<16x8xf32>,
    return
  }
  func.func @transform_0(%arg0: i32) -> (i32, i32) {
    %c0_i32 = arith.constant 0 : i32
    %c0_i32_0 = arith.constant 0 : i32
    return %c0_i32, %arg0 : i32, i32
  }
  func.func @transform_1(%arg0: i32) -> (i32, i32) {
    %c0_i32 = arith.constant 0 : i32
    %c0_i32_0 = arith.constant 0 : i32
    return %c0_i32, %arg0 : i32, i32
  }
  func.func @transform_2(%arg0: i32) -> (i32, i32) {
    %c0_i32 = arith.constant 0 : i32
    %c0_i32_0 = arith.constant 0 : i32
    %c0_i32_1 = arith.constant 0 : i32
    return %c0_i32, %c0_i32_0 : i32, i32
  }
  func.func @transform_3(%arg0: i32) -> (i32, i32) {
    %c0_i32 = arith.constant 0 : i32
    %c0_i32_0 = arith.constant 0 : i32
    %c0_i32_1 = arith.constant 0 : i32
    return %c0_i32, %c0_i32_0 : i32, i32
  }
  func.func @transform_4(%arg0: i32) -> (i32, i32) {
    %c0_i32 = arith.constant 0 : i32
    %c0_i32_0 = arith.constant 0 : i32
    %c0_i32_1 = arith.constant 0 : i32
    return %c0_i32, %c0_i32_0 : i32, i32
  }
  func.func @transform_5(%arg0: i32) -> (i32, i32) {
    %c0_i32 = arith.constant 0 : i32
    %c0_i32_0 = arith.constant 0 : i32
    %c0_i32_1 = arith.constant 0 : i32
    return %c0_i32, %c0_i32_0 : i32, i32
  }
  func.func @transform_6(%arg0: i32) -> (i32, i32) {
    %c0_i32 = arith.constant 0 : i32
    %c0_i32_0 = arith.constant 0 : i32
    %c0_i32_1 = arith.constant 0 : i32
    return %c0_i32, %c0_i32_0 : i32, i32
  }
  func.func @transform_7(%arg0: i32) -> (i32, i32) {
    %c0_i32 = arith.constant 0 : i32
    %c0_i32_0 = arith.constant 0 : i32
    %c0_i32_1 = arith.constant 0 : i32
    return %c0_i32, %c0_i32_0 : i32, i32
  }
  func.func @transform_8(%arg0: i32) -> (i32, i32) {
    %c0_i32 = arith.constant 0 : i32
    %c0_i32_0 = arith.constant 0 : i32
    %c0_i32_1 = arith.constant 0 : i32
    return %c0_i32, %c0_i32_0 : i32, i32
  }
  func.func @transform_9(%arg0: i32) -> (i32, i32) {
    %c0_i32 = arith.constant 0 : i32
    %c0_i32_0 = arith.constant 0 : i32
    %c0_i32_1 = arith.constant 0 : i32
    return %c0_i32, %c0_i32_0 : i32, i32
  }
  func.func @transform_10(%arg0: i32) -> (i32, i32) {
    %c0_i32 = arith.constant 0 : i32
    %c0_i32_0 = arith.constant 0 : i32
    return %c0_i32, %arg0 : i32, i32
  }
}

module attributes {stable_mosaic.version = 11 : i64} {
  func.func @vae_kernel(%arg0: i32, %arg1: memref<32x8xf32, #tpu.memory_space<vmem>>, %arg2: memref<8x8xf32, #tpu.memory_space<vmem>>, %arg3: memref<16x32xf32, #tpu.memory_space<vmem>>, %arg4: memref<16x1xf32, #tpu.memory_space<vmem>>, %arg5: memref<16x16xf32, #tpu.memory_space<vmem>>, %arg6: memref<16x1xf32, #tpu.memory_space<vmem>>, %arg7: memref<16x8xf32, #tpu.memory_space<vmem>>, %arg8: memref<16x1xf32, #tpu.memory_space<vmem>>, %arg9: memref<32x16xf32, #tpu.memory_space<vmem>>, %arg10: memref<32x1xf32, #tpu.memory_space<vmem>>, %arg11: memref<48x8xf32, #tpu.memory_space<vmem>>) attributes {dimension_semantics = [#tpu.dimension_semantics<parallel>], iteration_bounds = array<i64: 1>, scalar_prefetch = 0 : i64, scratch_operands = 0 : i64, tpu.core_type = #tpu.core_type<tc>, window_params = [{transform_indices = @transform_0, window_bounds = array<i64: 32, 8>}, {transform_indices = @transform_1, window_bounds = array<i64: 8, 8>}, {pipeline_mode = #tpu.pipeline_mode<synchronous>, transform_indices = @transform_2, window_bounds = array<i64: 16, 32>}, {pipeline_mode = #tpu.pipeline_mode<synchronous>, transform_indices = @transform_3, window_bounds = array<i64: 16, 1>}, {pipeline_mode = #tpu.pipeline_mode<synchronous>, transform_indices = @transform_4, window_bounds = array<i64: 16, 16>}, {pipeline_mode = #tpu.pipeline_mode<synchronous>, transform_indices = @transform_5, window_bounds = array<i64: 16, 1>}, {pipeline_mode = #tpu.pipeline_mode<synchronous>, transform_indices = @transform_6, window_bounds = array<i64: 16, 8>}, {pipeline_mode = #tpu.pipeline_mode<synchronous>, transform_indices = @transform_7, window_bounds = array<i64: 16, 1>}, {pipeline_mode = #tpu.pipeline_mode<synchronous>, transform_indices = @transform_8, window_bounds = array<i64: 32, 16>}, {pipeline_mode = #tpu.pipeline_mode<synchronous>, transform_indices = @transform_9, window_bounds = array<i64: 32, 1>}, {transform_indices = @transform_10, window_bounds = array<i64: 48, 8>}]} {
    %c0 = arith.constant 0 : index
    %c0_0 = arith.constant 0 : index
    %0 = vector.load %arg1[%c0, %c0_0] : memref<32x8xf32, #tpu.memory_space<vmem>>, vector<32x8xf32>
    %c0_1 = arith.constant 0 : index
    %c0_2 = arith.constant 0 : index
    %1 = vector.load %arg3[%c0_1, %c0_2] : memref<16x32xf32, #tpu.memory_space<vmem>>, vector<16x32xf32>
    %cst = arith.constant dense<0.000000e+00> : vector<16x8xf32>
    %2 = tpu.matmul %1, %0, %cst {dimension_numbers = #tpu.dot_dimension_numbers<[1], [0], [0], [1], [0, 0, 1, 1], [], []>} : vector<16x32xf32>, vector<32x8xf32>, vector<16x8xf32> -> vector<16x8xf32>
    %c0_3 = arith.constant 0 : index
    %c0_4 = arith.constant 0 : index
    %3 = vector.load %arg4[%c0_3, %c0_4] : memref<16x1xf32, #tpu.memory_space<vmem>>, vector<16x1xf32>
    %4 = vector.broadcast %3 : vector<16x1xf32> to vector<16x8xf32>
    %5 = arith.addf %2, %4 : vector<16x8xf32>
    %cst_5 = arith.constant 0.000000e+00 : f32
    %6 = vector.broadcast %cst_5 : f32 to vector<16x8xf32>
    %7 = arith.maximumf %5, %6 : vector<16x8xf32>
    %c0_6 = arith.constant 0 : index
    %c0_7 = arith.constant 0 : index
    %8 = vector.load %arg5[%c0_6, %c0_7] : memref<16x16xf32, #tpu.memory_space<vmem>>, vector<16x16xf32>
    %cst_8 = arith.constant dense<0.000000e+00> : vector<16x8xf32>
    %9 = tpu.matmul %8, %7, %cst_8 {dimension_numbers = #tpu.dot_dimension_numbers<[1], [0], [0], [1], [0, 0, 1, 1], [], []>} : vector<16x16xf32>, vector<16x8xf32>, vector<16x8xf32> -> vector<16x8xf32>
    %c0_9 = arith.constant 0 : index
    %c0_10 = arith.constant 0 : index
    %10 = vector.load %arg6[%c0_9, %c0_10] : memref<16x1xf32, #tpu.memory_space<vmem>>, vector<16x1xf32>
    %11 = vector.broadcast %10 : vector<16x1xf32> to vector<16x8xf32>
    %12 = arith.addf %9, %11 : vector<16x8xf32>
    %13 = vector.extract_strided_slice %12 {offsets = [0, 0], sizes = [8, 8], strides = [1, 1]} : vector<16x8xf32> to vector<8x8xf32>
    %14 = vector.extract_strided_slice %12 {offsets = [8, 0], sizes = [8, 8], strides = [1, 1]} : vector<16x8xf32> to vector<8x8xf32>
    %cst_11 = arith.constant 5.000000e-01 : f32
    %15 = vector.broadcast %cst_11 : f32 to vector<8x8xf32>
    %16 = arith.mulf %15, %14 : vector<8x8xf32>
    %17 = math.exp %16 : vector<8x8xf32>
    %c0_12 = arith.constant 0 : index
    %c0_13 = arith.constant 0 : index
    %18 = vector.load %arg2[%c0_12, %c0_13] : memref<8x8xf32, #tpu.memory_space<vmem>>, vector<8x8xf32>
    %19 = arith.mulf %18, %17 : vector<8x8xf32>
    %20 = arith.addf %19, %13 : vector<8x8xf32>
    %c0_14 = arith.constant 0 : index
    %c0_15 = arith.constant 0 : index
    %21 = vector.load %arg7[%c0_14, %c0_15] : memref<16x8xf32, #tpu.memory_space<vmem>>, vector<16x8xf32>
    %cst_16 = arith.constant dense<0.000000e+00> : vector<16x8xf32>
    %22 = tpu.matmul %21, %20, %cst_16 {dimension_numbers = #tpu.dot_dimension_numbers<[1], [0], [0], [1], [0, 0, 1, 1], [], []>} : vector<16x8xf32>, vector<8x8xf32>, vector<16x8xf32> -> vector<16x8xf32>
    %c0_17 = arith.constant 0 : index
    %c0_18 = arith.constant 0 : index
    %23 = vector.load %arg8[%c0_17, %c0_18] : memref<16x1xf32, #tpu.memory_space<vmem>>, vector<16x1xf32>
    %24 = vector.broadcast %23 : vector<16x1xf32> to vector<16x8xf32>
    %25 = arith.addf %22, %24 : vector<16x8xf32>
    %cst_19 = arith.constant 0.000000e+00 : f32
    %26 = vector.broadcast %cst_19 : f32 to vector<16x8xf32>
    %27 = arith.maximumf %25, %26 : vector<16x8xf32>
    %c0_20 = arith.constant 0 : index
    %c0_21 = arith.constant 0 : index
    %28 = vector.load %arg9[%c0_20, %c0_21] : memref<32x16xf32, #tpu.memory_space<vmem>>, vector<32x16xf32>
    %cst_22 = arith.constant dense<0.000000e+00> : vector<32x8xf32>
    %29 = tpu.matmul %28, %27, %cst_22 {dimension_numbers = #tpu.dot_dimension_numbers<[1], [0], [0], [1], [0, 0, 1, 1], [], []>} : vector<32x16xf32>, vector<16x8xf32>, vector<32x8xf32> -> vector<32x8xf32>
    %c0_23 = arith.constant 0 : index
    %c0_24 = arith.constant 0 : index
    %30 = vector.load %arg10[%c0_23, %c0_24] : memref<32x1xf32, #tpu.memory_space<vmem>>, vector<32x1xf32>
    %31 = vector.broadcast %30 : vector<32x1xf32> to vector<32x8xf32>
    %32 = arith.addf %29, %31 : vector<32x8xf32>
    %cst_25 = arith.constant 5.000000e-01 : f32
    %33 = vector.broadcast %cst_25 : f32 to vector<32x8xf32>
    %34 = arith.mulf %33, %32 : vector<32x8xf32>
    %35 = math.tanh %34 : vector<32x8xf32>
    %cst_26 = arith.constant 5.000000e-01 : f32
    %36 = vector.broadcast %cst_26 : f32 to vector<32x8xf32>
    %37 = arith.mulf %36, %35 : vector<32x8xf32>
    %cst_27 = arith.constant 5.000000e-01 : f32
    %38 = vector.broadcast %cst_27 : f32 to vector<32x8xf32>
    %39 = arith.addf %37, %38 : vector<32x8xf32>
    %c0_28 = arith.constant 0 : index
    %c0_29 = arith.constant 0 : index
    %40 = vector.load %arg11[%c0_28, %c0_29] : memref<48x8xf32, #tpu.memory_space<vmem>>, vector<32x8xf32>
    tpu.vector_store %arg11[%c0_28, %c0_29], %39 {strides = array<i32>} : memref<48x8xf32, #tpu.memory_space<vmem>>, vector<32x8xf32>,
    %c32 = arith.constant 32 : index
    %c0_30 = arith.constant 0 : index
    %41 = vector.load %arg11[%c32, %c0_30] : memref<48x8xf32, #tpu.memory_space<vmem>>, vector<16x8xf32>
    tpu.vector_store %arg11[%c32, %c0_30], %12 {strides = array<i32>} : memref<48x8xf32, #tpu.memory_space<vmem>>, vector<16x8xf32>,
    return
  }
  func.func @transform_0(%arg0: i32) -> (i32, i32) {
    %c0_i32 = arith.constant 0 : i32
    %c0_i32_0 = arith.constant 0 : i32
    return %c0_i32, %arg0 : i32, i32
  }
  func.func @transform_1(%arg0: i32) -> (i32, i32) {
    %c0_i32 = arith.constant 0 : i32
    %c0_i32_0 = arith.constant 0 : i32
    return %c0_i32, %arg0 : i32, i32
  }
  func.func @transform_2(%arg0: i32) -> (i32, i32) {
    %c0_i32 = arith.constant 0 : i32
    %c0_i32_0 = arith.constant 0 : i32
    %c0_i32_1 = arith.constant 0 : i32
    return %c0_i32, %c0_i32_0 : i32, i32
  }
  func.func @transform_3(%arg0: i32) -> (i32, i32) {
    %c0_i32 = arith.constant 0 : i32
    %c0_i32_0 = arith.constant 0 : i32
    %c0_i32_1 = arith.constant 0 : i32
    return %c0_i32, %c0_i32_0 : i32, i32
  }
  func.func @transform_4(%arg0: i32) -> (i32, i32) {
    %c0_i32 = arith.constant 0 : i32
    %c0_i32_0 = arith.constant 0 : i32
    %c0_i32_1 = arith.constant 0 : i32
    return %c0_i32, %c0_i32_0 : i32, i32
  }
  func.func @transform_5(%arg0: i32) -> (i32, i32) {
    %c0_i32 = arith.constant 0 : i32
    %c0_i32_0 = arith.constant 0 : i32
    %c0_i32_1 = arith.constant 0 : i32
    return %c0_i32, %c0_i32_0 : i32, i32
  }
  func.func @transform_6(%arg0: i32) -> (i32, i32) {
    %c0_i32 = arith.constant 0 : i32
    %c0_i32_0 = arith.constant 0 : i32
    %c0_i32_1 = arith.constant 0 : i32
    return %c0_i32, %c0_i32_0 : i32, i32
  }
  func.func @transform_7(%arg0: i32) -> (i32, i32) {
    %c0_i32 = arith.constant 0 : i32
    %c0_i32_0 = arith.constant 0 : i32
    %c0_i32_1 = arith.constant 0 : i32
    return %c0_i32, %c0_i32_0 : i32, i32
  }
  func.func @transform_8(%arg0: i32) -> (i32, i32) {
    %c0_i32 = arith.constant 0 : i32
    %c0_i32_0 = arith.constant 0 : i32
    %c0_i32_1 = arith.constant 0 : i32
    return %c0_i32, %c0_i32_0 : i32, i32
  }
  func.func @transform_9(%arg0: i32) -> (i32, i32) {
    %c0_i32 = arith.constant 0 : i32
    %c0_i32_0 = arith.constant 0 : i32
    %c0_i32_1 = arith.constant 0 : i32
    return %c0_i32, %c0_i32_0 : i32, i32
  }
  func.func @transform_10(%arg0: i32) -> (i32, i32) {
    %c0_i32 = arith.constant 0 : i32
    %c0_i32_0 = arith.constant 0 : i32
    return %c0_i32, %arg0 : i32, i32
  }
}

</mosaic_0001>

<llo_original>
// kernel: tpu_custom_call.1
$region0: #{tpu_custom_call.1}
  #allocation0 [shape = 'u32[]', space=smem, size = 0x4, offset = 0x4, fixed_abs, tag = 'smem constant byte address 0x4 - core index']
  #allocation1 [shape = 'u32[72,128]{1,0:T(1,128)}', space=vmem, size = 0x9000, scoped, tag = 'internal scratch']
  %s0 = inlined_call_operand.vmem [shape: f32[32,8], index: 0, kind: input, shape index: {}]
  %s1 = inlined_call_operand.vmem [shape: f32[8,8], index: 1, kind: input, shape index: {}]
  %s2 = inlined_call_operand.vmem [shape: f32[16,32], index: 2, kind: input, shape index: {}]
  %s3 = inlined_call_operand.vmem [shape: f32[16,1], index: 3, kind: input, shape index: {}]
  %s4 = inlined_call_operand.vmem [shape: f32[16,16], index: 4, kind: input, shape index: {}]
  %s5 = inlined_call_operand.vmem [shape: f32[16,1], index: 5, kind: input, shape index: {}]
  %s6 = inlined_call_operand.vmem [shape: f32[16,8], index: 6, kind: input, shape index: {}]
  %s7 = inlined_call_operand.vmem [shape: f32[16,1], index: 7, kind: input, shape index: {}]
  %s8 = inlined_call_operand.vmem [shape: f32[32,16], index: 8, kind: input, shape index: {}]
  %s9 = inlined_call_operand.vmem [shape: f32[32,1], index: 9, kind: input, shape index: {}]
  %s10 = inlined_call_operand.vmem [shape: f32[48,8], index: 10, kind: output, shape index: {}]
  %s11 = sld [smem:[#allocation0]]
  $region50: #{tpu_custom_call.1} parent=0
    _
  %s13 = ssub.s32 1, %s11
  %s14 = scalar_select 0, %s13, %s11
  // Predicated region
  $region2: #{tpu_custom_call.1} parent=0 // pred_check
    _
  $region3: #{tpu_custom_call.1} parent=0 // pred_check_branch
    %16 = sbr.rel (0) target = $region5
  $region4: #{tpu_custom_call.1} parent=0 // pred_region
    _
  $region5: #{tpu_custom_call.1} parent=0 // pred_fallthru
    _
  // Predicated region
  $region6: #{tpu_custom_call.1} parent=0 // pred_check
    _
  $region7: #{tpu_custom_call.1} parent=0 // pred_check_branch
    %18 = sbr.rel (0) target = $region9
  $region8: #{tpu_custom_call.1} parent=0 // pred_region
    _
  $region9: #{tpu_custom_call.1} parent=0 // pred_fallthru
    _
  // Predicated region
  $region10: #{tpu_custom_call.1} parent=0 // pred_check
    _
  $region11: #{tpu_custom_call.1} parent=0 // pred_check_branch
    %20 = sbr.rel (0) target = $region13
  $region12: #{tpu_custom_call.1} parent=0 // pred_region
    _
  $region13: #{tpu_custom_call.1} parent=0 // pred_fallthru
    _
  // Predicated region
  $region14: #{tpu_custom_call.1} parent=0 // pred_check
    _
  $region15: #{tpu_custom_call.1} parent=0 // pred_check_branch
    %22 = sbr.rel (0) target = $region17
  $region16: #{tpu_custom_call.1} parent=0 // pred_region
    _
  $region17: #{tpu_custom_call.1} parent=0 // pred_fallthru
    _
  // Predicated region
  $region18: #{tpu_custom_call.1} parent=0 // pred_check
    _
  $region19: #{tpu_custom_call.1} parent=0 // pred_check_branch
    %24 = sbr.rel (0) target = $region21
  $region20: #{tpu_custom_call.1} parent=0 // pred_region
    _
  $region21: #{tpu_custom_call.1} parent=0 // pred_fallthru
    _
  // Predicated region
  $region22: #{tpu_custom_call.1} parent=0 // pred_check
    _
  $region23: #{tpu_custom_call.1} parent=0 // pred_check_branch
    %26 = sbr.rel (0) target = $region25
  $region24: #{tpu_custom_call.1} parent=0 // pred_region
    _
  $region25: #{tpu_custom_call.1} parent=0 // pred_fallthru
    _
  // Predicated region
  $region26: #{tpu_custom_call.1} parent=0 // pred_check
    _
  $region27: #{tpu_custom_call.1} parent=0 // pred_check_branch
    %28 = sbr.rel (0) target = $region29
  $region28: #{tpu_custom_call.1} parent=0 // pred_region
    _
  $region29: #{tpu_custom_call.1} parent=0 // pred_fallthru
    _
  // Predicated region
  $region30: #{tpu_custom_call.1} parent=0 // pred_check
    _
  $region31: #{tpu_custom_call.1} parent=0 // pred_check_branch
    %30 = sbr.rel (0) target = $region33
  $region32: #{tpu_custom_call.1} parent=0 // pred_region
    _
  $region33: #{tpu_custom_call.1} parent=0 // pred_fallthru
    _
  // Predicated region
  $region34: #{tpu_custom_call.1} parent=0 // pred_check
    _
  $region35: #{tpu_custom_call.1} parent=0 // pred_check_branch
    %32 = sbr.rel (0) target = $region37
  $region36: #{tpu_custom_call.1} parent=0 // pred_region
    _
  $region37: #{tpu_custom_call.1} parent=0 // pred_fallthru
    _
  // Predicated region
  $region38: #{tpu_custom_call.1} parent=0 // pred_check
    _
  $region39: #{tpu_custom_call.1} parent=0 // pred_check_branch
    %34 = sbr.rel (0) target = $region41
  $region40: #{tpu_custom_call.1} parent=0 // pred_region
    _
  $region41: #{tpu_custom_call.1} parent=0 // pred_fallthru
    _
  %v35 = vld [vmem:[%s0] sm:$0xff]
  %v36 = vld [vmem:[%s0 + $0x8] sm:$0xff]
  %v37 = vld [vmem:[%s0 + $0x10] sm:$0xff]
  %v38 = vld [vmem:[%s0 + $0x18] sm:$0xff]
  %v39 = vld [vmem:[%s2] sm:$0xff]
  %v40 = vld [vmem:[%s2 + $0x8] sm:$0xff]
  %v41 = vld [vmem:[%s3] sm:$0xff]
  %v42 = vld [vmem:[%s3 + $0x8] sm:$0xff]
  %44 = vset.pattern.permute.xlu0 0
  %45 = vperm.xlu0 %44, %v41
  %v46 = vpop.permute.xlu0 %45
  %49 = vset.pattern.permute.xlu0 0
  %50 = vperm.xlu0 %49, %v42
  %v51 = vpop.permute.xlu0 %50
  %vm53 = vcmask 261120
  %v55 = vsel %vm53, %v39, 0
  %v58 = vsel %vm53, %v40, 0
  %60 = vmatpush.msra.mxu0 0.0
  %61 = vmatpush.msra.mxu0 0.0
  %62 = vmatpush.msra.mxu0 0.0
  %63 = vmatpush.msra.mxu0 0.0
  %64 = vmatpush.msra.mxu0 0.0
  %65 = vmatpush.msra.mxu0 0.0
  %66 = vmatpush.msra.mxu0 0.0
  %67 = vmatpush.msra.mxu0 0.0
  %68 = vmatpush.msra.mxu0 0.0
  %69 = vmatpush.msra.mxu0 0.0
  %70 = vmatpush.msra.mxu0 0.0
  %71 = vmatpush.msra.mxu0 0.0
  %72 = vmatpush.msra.mxu0 %v38
  %73 = vmatpush.msra.mxu0 %v37
  %74 = vmatpush.msra.mxu0 %v36
  %75 = vmatpush.msra.mxu0 %v35
  %76 = vmatmul.f32.gmra.mxu0 %v55
  %v77 = vpop.f32.mrf.mxu0
  %v78 = vadd.f32 %v46, %v77
  %79 = vmatmul.f32.gmra.mxu0 %v58
  %v80 = vpop.f32.mrf.mxu0
  %v81 = vadd.f32 %v51, %v80
  %82 = vdwg.mxu0
  %v83 = vmax.f32 %v78, 0.0
  %v84 = vmax.f32 %v81, 0.0
  %v85 = vld [vmem:[%s4] sm:$0xff]
  %v86 = vld [vmem:[%s4 + $0x8] sm:$0xff]
  %v87 = vld [vmem:[%s5] sm:$0xff]
  %v88 = vld [vmem:[%s5 + $0x8] sm:$0xff]
  %90 = vset.pattern.permute.xlu0 0
  %91 = vperm.xlu0 %90, %v87
  %v92 = vpop.permute.xlu0 %91
  %95 = vset.pattern.permute.xlu0 0
  %96 = vperm.xlu0 %95, %v88
  %v97 = vpop.permute.xlu0 %96
  %vm99 = vcmask 130048
  %v101 = vsel %vm99, %v85, 0
  %v104 = vsel %vm99, %v86, 0
  %106 = vmatpush.msra.mxu0 0.0
  %107 = vmatpush.msra.mxu0 0.0
  %108 = vmatpush.msra.mxu0 0.0
  %109 = vmatpush.msra.mxu0 0.0
  %110 = vmatpush.msra.mxu0 0.0
  %111 = vmatpush.msra.mxu0 0.0
  %112 = vmatpush.msra.mxu0 0.0
  %113 = vmatpush.msra.mxu0 0.0
  %114 = vmatpush.msra.mxu0 0.0
  %115 = vmatpush.msra.mxu0 0.0
  %116 = vmatpush.msra.mxu0 0.0
  %117 = vmatpush.msra.mxu0 0.0
  %118 = vmatpush.msra.mxu0 0.0
  %119 = vmatpush.msra.mxu0 0.0
  %120 = vmatpush.msra.mxu0 %v84
  %121 = vmatpush.msra.mxu0 %v83
  %122 = vmatmul.f32.gmra.mxu0 %v101
  %v123 = vpop.f32.mrf.mxu0
  %v124 = vadd.f32 %v92, %v123
  %125 = vmatmul.f32.gmra.mxu0 %v104
  %v126 = vpop.f32.mrf.mxu0
  %v127 = vadd.f32 %v97, %v126
  %128 = vdwg.mxu0
  %v129 = vmul.f32 %v127, 0.5
  %v130 = vmul.f32 %v129, 1.442695
  %v131 = vpow.pop %v130
  %v132 = vld [vmem:[%s1] sm:$0xff]
  %v133 = vmul.f32 %v132, %v131
  %v134 = vadd.f32 %v133, %v124
  %v135 = vld [vmem:[%s6] sm:$0xff]
  %v136 = vld [vmem:[%s6 + $0x8] sm:$0xff]
  %v137 = vld [vmem:[%s7] sm:$0xff]
  %v138 = vld [vmem:[%s7 + $0x8] sm:$0xff]
  %140 = vset.pattern.permute.xlu0 0
  %141 = vperm.xlu0 %140, %v137
  %v142 = vpop.permute.xlu0 %141
  %145 = vset.pattern.permute.xlu0 0
  %146 = vperm.xlu0 %145, %v138
  %v147 = vpop.permute.xlu0 %146
  %vm149 = vcmask 64512
  %v151 = vsel %vm149, %v135, 0
  %v154 = vsel %vm149, %v136, 0
  %156 = vmatpush.msra.mxu0 0.0
  %157 = vmatpush.msra.mxu0 0.0
  %158 = vmatpush.msra.mxu0 0.0
  %159 = vmatpush.msra.mxu0 0.0
  %160 = vmatpush.msra.mxu0 0.0
  %161 = vmatpush.msra.mxu0 0.0
  %162 = vmatpush.msra.mxu0 0.0
  %163 = vmatpush.msra.mxu0 0.0
  %164 = vmatpush.msra.mxu0 0.0
  %165 = vmatpush.msra.mxu0 0.0
  %166 = vmatpush.msra.mxu0 0.0
  %167 = vmatpush.msra.mxu0 0.0
  %168 = vmatpush.msra.mxu0 0.0
  %169 = vmatpush.msra.mxu0 0.0
  %170 = vmatpush.msra.mxu0 0.0
  %171 = vmatpush.msra.mxu0 %v134
  %172 = vmatmul.f32.gmra.mxu0 %v151
  %v173 = vpop.f32.mrf.mxu0
  %v174 = vadd.f32 %v142, %v173
  %175 = vmatmul.f32.gmra.mxu0 %v154
  %v176 = vpop.f32.mrf.mxu0
  %v177 = vadd.f32 %v147, %v176
  %178 = vdwg.mxu0
  %v179 = vmax.f32 %v174, 0.0
  %v180 = vmax.f32 %v177, 0.0
  %v181 = vld [vmem:[%s8] sm:$0xff]
  %v182 = vld [vmem:[%s8 + $0x8] sm:$0xff]
  %v183 = vld [vmem:[%s8 + $0x10] sm:$0xff]
  %v184 = vld [vmem:[%s8 + $0x18] sm:$0xff]
  %v185 = vld [vmem:[%s9] sm:$0xff]
  %v186 = vld [vmem:[%s9 + $0x8] sm:$0xff]
  %v187 = vld [vmem:[%s9 + $0x10] sm:$0xff]
  %v188 = vld [vmem:[%s9 + $0x18] sm:$0xff]
  %190 = vset.pattern.permute.xlu0 0
  %191 = vperm.xlu0 %190, %v185
  %v192 = vpop.permute.xlu0 %191
  %195 = vset.pattern.permute.xlu0 0
  %196 = vperm.xlu0 %195, %v186
  %v197 = vpop.permute.xlu0 %196
  %200 = vset.pattern.permute.xlu0 0
  %201 = vperm.xlu0 %200, %v187
  %v202 = vpop.permute.xlu0 %201
  %205 = vset.pattern.permute.xlu0 0
  %206 = vperm.xlu0 %205, %v188
  %v207 = vpop.permute.xlu0 %206
  %v210 = vsel %vm99, %v181, 0
  %v213 = vsel %vm99, %v182, 0
  %v216 = vsel %vm99, %v183, 0
  %v219 = vsel %vm99, %v184, 0
  %221 = vmatpush.msra.mxu0 0.0
  %222 = vmatpush.msra.mxu0 0.0
  %223 = vmatpush.msra.mxu0 0.0
  %224 = vmatpush.msra.mxu0 0.0
  %225 = vmatpush.msra.mxu0 0.0
  %226 = vmatpush.msra.mxu0 0.0
  %227 = vmatpush.msra.mxu0 0.0
  %228 = vmatpush.msra.mxu0 0.0
  %229 = vmatpush.msra.mxu0 0.0
  %230 = vmatpush.msra.mxu0 0.0
  %231 = vmatpush.msra.mxu0 0.0
  %232 = vmatpush.msra.mxu0 0.0
  %233 = vmatpush.msra.mxu0 0.0
  %234 = vmatpush.msra.mxu0 0.0
  %235 = vmatpush.msra.mxu0 %v180
  %236 = vmatpush.msra.mxu0 %v179
  %237 = vmatmul.f32.gmra.mxu0 %v210
  %v238 = vpop.f32.mrf.mxu0
  %v239 = vadd.f32 %v192, %v238
  %240 = vmatmul.f32.gmra.mxu0 %v213
  %v241 = vpop.f32.mrf.mxu0
  %v242 = vadd.f32 %v197, %v241
  %243 = vmatmul.f32.gmra.mxu0 %v216
  %v244 = vpop.f32.mrf.mxu0
  %v245 = vadd.f32 %v202, %v244
  %246 = vmatmul.f32.gmra.mxu0 %v219
  %v247 = vpop.f32.mrf.mxu0
  %v248 = vadd.f32 %v207, %v247
  %249 = vdwg.mxu0
  %v250 = vmul.f32 %v239, 0.5
  %v251 = vmul.f32 %v242, 0.5
  %v252 = vmul.f32 %v245, 0.5
  %v253 = vmul.f32 %v248, 0.5
  %v254 = vtanh.pop %v250
  %v255 = vtanh.pop %v251
  %v256 = vtanh.pop %v252
  %v257 = vtanh.pop %v253
  %v258 = vmul.f32 %v254, 0.5
  %v259 = vmul.f32 %v255, 0.5
  %v260 = vmul.f32 %v256, 0.5
  %v261 = vmul.f32 %v257, 0.5
  %v262 = vadd.f32 %v258, 0.5
  %v263 = vadd.f32 %v259, 0.5
  %v264 = vadd.f32 %v260, 0.5
  %v265 = vadd.f32 %v261, 0.5
  %266 = vst.msk [vmem:[%s10] sm:$0xff] %vm149, %v262
  %267 = vst.msk [vmem:[%s10 + $0x8] sm:$0xff] %vm149, %v263
  %268 = vst.msk [vmem:[%s10 + $0x10] sm:$0xff] %vm149, %v264
  %269 = vst.msk [vmem:[%s10 + $0x18] sm:$0xff] %vm149, %v265
  %270 = vst.msk [vmem:[%s10 + $0x20] sm:$0xff] %vm149, %v124
  %271 = vst.msk [vmem:[%s10 + $0x28] sm:$0xff] %vm149, %v127
  // Predicated region
  $region42: #{tpu_custom_call.1} parent=0 // pred_check
    _
  $region43: #{tpu_custom_call.1} parent=0 // pred_check_branch
    %273 = sbr.rel (0) target = $region45
  $region44: #{tpu_custom_call.1} parent=0 // pred_region
    _
  $region45: #{tpu_custom_call.1} parent=0 // pred_fallthru
    _
  // Predicated region
  $region46: #{tpu_custom_call.1} parent=0 // pred_check
    _
  $region47: #{tpu_custom_call.1} parent=0 // pred_check_branch
    %275 = sbr.rel (0) target = $region49
  $region48: #{tpu_custom_call.1} parent=0 // pred_region
    _
  $region49: #{tpu_custom_call.1} parent=0 // pred_fallthru
    _

// kernel: tpu_custom_call.1
$region0: #{tpu_custom_call.1}
  #allocation0 [shape = 'u32[]', space=smem, size = 0x4, offset = 0x4, fixed_abs, tag = 'smem constant byte address 0x4 - core index']
  #allocation1 [shape = 'u32[72,128]{1,0:T(1,128)}', space=vmem, size = 0x9000, scoped, tag = 'internal scratch']
  %s0 = inlined_call_operand.vmem [shape: f32[32,8], index: 0, kind: input, shape index: {}]
  %s1 = inlined_call_operand.vmem [shape: f32[8,8], index: 1, kind: input, shape index: {}]
  %s2 = inlined_call_operand.vmem [shape: f32[16,32], index: 2, kind: input, shape index: {}]
  %s3 = inlined_call_operand.vmem [shape: f32[16,1], index: 3, kind: input, shape index: {}]
  %s4 = inlined_call_operand.vmem [shape: f32[16,16], index: 4, kind: input, shape index: {}]
  %s5 = inlined_call_operand.vmem [shape: f32[16,1], index: 5, kind: input, shape index: {}]
  %s6 = inlined_call_operand.vmem [shape: f32[16,8], index: 6, kind: input, shape index: {}]
  %s7 = inlined_call_operand.vmem [shape: f32[16,1], index: 7, kind: input, shape index: {}]
  %s8 = inlined_call_operand.vmem [shape: f32[32,16], index: 8, kind: input, shape index: {}]
  %s9 = inlined_call_operand.vmem [shape: f32[32,1], index: 9, kind: input, shape index: {}]
  %s10 = inlined_call_operand.vmem [shape: f32[48,8], index: 10, kind: output, shape index: {}]
  %s11 = sld [smem:[#allocation0]]
  $region50: #{tpu_custom_call.1} parent=0
    _
  %s13 = ssub.s32 1, %s11
  %s14 = scalar_select 0, %s13, %s11
  // Predicated region
  $region2: #{tpu_custom_call.1} parent=0 // pred_check
    _
  $region3: #{tpu_custom_call.1} parent=0 // pred_check_branch
    %16 = sbr.rel (0) target = $region5
  $region4: #{tpu_custom_call.1} parent=0 // pred_region
    _
  $region5: #{tpu_custom_call.1} parent=0 // pred_fallthru
    _
  // Predicated region
  $region6: #{tpu_custom_call.1} parent=0 // pred_check
    _
  $region7: #{tpu_custom_call.1} parent=0 // pred_check_branch
    %18 = sbr.rel (0) target = $region9
  $region8: #{tpu_custom_call.1} parent=0 // pred_region
    _
  $region9: #{tpu_custom_call.1} parent=0 // pred_fallthru
    _
  // Predicated region
  $region10: #{tpu_custom_call.1} parent=0 // pred_check
    _
  $region11: #{tpu_custom_call.1} parent=0 // pred_check_branch
    %20 = sbr.rel (0) target = $region13
  $region12: #{tpu_custom_call.1} parent=0 // pred_region
    _
  $region13: #{tpu_custom_call.1} parent=0 // pred_fallthru
    _
  // Predicated region
  $region14: #{tpu_custom_call.1} parent=0 // pred_check
    _
  $region15: #{tpu_custom_call.1} parent=0 // pred_check_branch
    %22 = sbr.rel (0) target = $region17
  $region16: #{tpu_custom_call.1} parent=0 // pred_region
    _
  $region17: #{tpu_custom_call.1} parent=0 // pred_fallthru
    _
  // Predicated region
  $region18: #{tpu_custom_call.1} parent=0 // pred_check
    _
  $region19: #{tpu_custom_call.1} parent=0 // pred_check_branch
    %24 = sbr.rel (0) target = $region21
  $region20: #{tpu_custom_call.1} parent=0 // pred_region
    _
  $region21: #{tpu_custom_call.1} parent=0 // pred_fallthru
    _
  // Predicated region
  $region22: #{tpu_custom_call.1} parent=0 // pred_check
    _
  $region23: #{tpu_custom_call.1} parent=0 // pred_check_branch
    %26 = sbr.rel (0) target = $region25
  $region24: #{tpu_custom_call.1} parent=0 // pred_region
    _
  $region25: #{tpu_custom_call.1} parent=0 // pred_fallthru
    _
  // Predicated region
  $region26: #{tpu_custom_call.1} parent=0 // pred_check
    _
  $region27: #{tpu_custom_call.1} parent=0 // pred_check_branch
    %28 = sbr.rel (0) target = $region29
  $region28: #{tpu_custom_call.1} parent=0 // pred_region
    _
  $region29: #{tpu_custom_call.1} parent=0 // pred_fallthru
    _
  // Predicated region
  $region30: #{tpu_custom_call.1} parent=0 // pred_check
    _
  $region31: #{tpu_custom_call.1} parent=0 // pred_check_branch
    %30 = sbr.rel (0) target = $region33
  $region32: #{tpu_custom_call.1} parent=0 // pred_region
    _
  $region33: #{tpu_custom_call.1} parent=0 // pred_fallthru
    _
  // Predicated region
  $region34: #{tpu_custom_call.1} parent=0 // pred_check
    _
  $region35: #{tpu_custom_call.1} parent=0 // pred_check_branch
    %32 = sbr.rel (0) target = $region37
  $region36: #{tpu_custom_call.1} parent=0 // pred_region
    _
  $region37: #{tpu_custom_call.1} parent=0 // pred_fallthru
    _
  // Predicated region
  $region38: #{tpu_custom_call.1} parent=0 // pred_check
    _
  $region39: #{tpu_custom_call.1} parent=0 // pred_check_branch
    %34 = sbr.rel (0) target = $region41
  $region40: #{tpu_custom_call.1} parent=0 // pred_region
    _
  $region41: #{tpu_custom_call.1} parent=0 // pred_fallthru
    _
  %v35 = vld [vmem:[%s0] sm:$0xff]
  %v36 = vld [vmem:[%s0 + $0x8] sm:$0xff]
  %v37 = vld [vmem:[%s0 + $0x10] sm:$0xff]
  %v38 = vld [vmem:[%s0 + $0x18] sm:$0xff]
  %v39 = vld [vmem:[%s2] sm:$0xff]
  %v40 = vld [vmem:[%s2 + $0x8] sm:$0xff]
  %v41 = vld [vmem:[%s3] sm:$0xff]
  %v42 = vld [vmem:[%s3 + $0x8] sm:$0xff]
  %44 = vset.pattern.permute.xlu0 0
  %45 = vperm.xlu0 %44, %v41
  %v46 = vpop.permute.xlu0 %45
  %49 = vset.pattern.permute.xlu0 0
  %50 = vperm.xlu0 %49, %v42
  %v51 = vpop.permute.xlu0 %50
  %vm53 = vcmask 261120
  %v55 = vsel %vm53, %v39, 0
  %v58 = vsel %vm53, %v40, 0
  %60 = vmatpush.msra.mxu0 0.0
  %61 = vmatpush.msra.mxu0 0.0
  %62 = vmatpush.msra.mxu0 0.0
  %63 = vmatpush.msra.mxu0 0.0
  %64 = vmatpush.msra.mxu0 0.0
  %65 = vmatpush.msra.mxu0 0.0
  %66 = vmatpush.msra.mxu0 0.0
  %67 = vmatpush.msra.mxu0 0.0
  %68 = vmatpush.msra.mxu0 0.0
  %69 = vmatpush.msra.mxu0 0.0
  %70 = vmatpush.msra.mxu0 0.0
  %71 = vmatpush.msra.mxu0 0.0
  %72 = vmatpush.msra.mxu0 %v38
  %73 = vmatpush.msra.mxu0 %v37
  %74 = vmatpush.msra.mxu0 %v36
  %75 = vmatpush.msra.mxu0 %v35
  %76 = vmatmul.f32.gmra.mxu0 %v55
  %v77 = vpop.f32.mrf.mxu0
  %v78 = vadd.f32 %v46, %v77
  %79 = vmatmul.f32.gmra.mxu0 %v58
  %v80 = vpop.f32.mrf.mxu0
  %v81 = vadd.f32 %v51, %v80
  %82 = vdwg.mxu0
  %v83 = vmax.f32 %v78, 0.0
  %v84 = vmax.f32 %v81, 0.0
  %v85 = vld [vmem:[%s4] sm:$0xff]
  %v86 = vld [vmem:[%s4 + $0x8] sm:$0xff]
  %v87 = vld [vmem:[%s5] sm:$0xff]
  %v88 = vld [vmem:[%s5 + $0x8] sm:$0xff]
  %90 = vset.pattern.permute.xlu0 0
  %91 = vperm.xlu0 %90, %v87
  %v92 = vpop.permute.xlu0 %91
  %95 = vset.pattern.permute.xlu0 0
  %96 = vperm.xlu0 %95, %v88
  %v97 = vpop.permute.xlu0 %96
  %vm99 = vcmask 130048
  %v101 = vsel %vm99, %v85, 0
  %v104 = vsel %vm99, %v86, 0
  %106 = vmatpush.msra.mxu0 0.0
  %107 = vmatpush.msra.mxu0 0.0
  %108 = vmatpush.msra.mxu0 0.0
  %109 = vmatpush.msra.mxu0 0.0
  %110 = vmatpush.msra.mxu0 0.0
  %111 = vmatpush.msra.mxu0 0.0
  %112 = vmatpush.msra.mxu0 0.0
  %113 = vmatpush.msra.mxu0 0.0
  %114 = vmatpush.msra.mxu0 0.0
  %115 = vmatpush.msra.mxu0 0.0
  %116 = vmatpush.msra.mxu0 0.0
  %117 = vmatpush.msra.mxu0 0.0
  %118 = vmatpush.msra.mxu0 0.0
  %119 = vmatpush.msra.mxu0 0.0
  %120 = vmatpush.msra.mxu0 %v84
  %121 = vmatpush.msra.mxu0 %v83
  %122 = vmatmul.f32.gmra.mxu0 %v101
  %v123 = vpop.f32.mrf.mxu0
  %v124 = vadd.f32 %v92, %v123
  %125 = vmatmul.f32.gmra.mxu0 %v104
  %v126 = vpop.f32.mrf.mxu0
  %v127 = vadd.f32 %v97, %v126
  %128 = vdwg.mxu0
  %v129 = vmul.f32 %v127, 0.5
  %v130 = vmul.f32 %v129, 1.442695
  %v131 = vpow.pop %v130
  %v132 = vld [vmem:[%s1] sm:$0xff]
  %v133 = vmul.f32 %v132, %v131
  %v134 = vadd.f32 %v133, %v124
  %v135 = vld [vmem:[%s6] sm:$0xff]
  %v136 = vld [vmem:[%s6 + $0x8] sm:$0xff]
  %v137 = vld [vmem:[%s7] sm:$0xff]
  %v138 = vld [vmem:[%s7 + $0x8] sm:$0xff]
  %140 = vset.pattern.permute.xlu0 0
  %141 = vperm.xlu0 %140, %v137
  %v142 = vpop.permute.xlu0 %141
  %145 = vset.pattern.permute.xlu0 0
  %146 = vperm.xlu0 %145, %v138
  %v147 = vpop.permute.xlu0 %146
  %vm149 = vcmask 64512
  %v151 = vsel %vm149, %v135, 0
  %v154 = vsel %vm149, %v136, 0
  %156 = vmatpush.msra.mxu0 0.0
  %157 = vmatpush.msra.mxu0 0.0
  %158 = vmatpush.msra.mxu0 0.0
  %159 = vmatpush.msra.mxu0 0.0
  %160 = vmatpush.msra.mxu0 0.0
  %161 = vmatpush.msra.mxu0 0.0
  %162 = vmatpush.msra.mxu0 0.0
  %163 = vmatpush.msra.mxu0 0.0
  %164 = vmatpush.msra.mxu0 0.0
  %165 = vmatpush.msra.mxu0 0.0
  %166 = vmatpush.msra.mxu0 0.0
  %167 = vmatpush.msra.mxu0 0.0
  %168 = vmatpush.msra.mxu0 0.0
  %169 = vmatpush.msra.mxu0 0.0
  %170 = vmatpush.msra.mxu0 0.0
  %171 = vmatpush.msra.mxu0 %v134
  %172 = vmatmul.f32.gmra.mxu0 %v151
  %v173 = vpop.f32.mrf.mxu0
  %v174 = vadd.f32 %v142, %v173
  %175 = vmatmul.f32.gmra.mxu0 %v154
  %v176 = vpop.f32.mrf.mxu0
  %v177 = vadd.f32 %v147, %v176
  %178 = vdwg.mxu0
  %v179 = vmax.f32 %v174, 0.0
  %v180 = vmax.f32 %v177, 0.0
  %v181 = vld [vmem:[%s8] sm:$0xff]
  %v182 = vld [vmem:[%s8 + $0x8] sm:$0xff]
  %v183 = vld [vmem:[%s8 + $0x10] sm:$0xff]
  %v184 = vld [vmem:[%s8 + $0x18] sm:$0xff]
  %v185 = vld [vmem:[%s9] sm:$0xff]
  %v186 = vld [vmem:[%s9 + $0x8] sm:$0xff]
  %v187 = vld [vmem:[%s9 + $0x10] sm:$0xff]
  %v188 = vld [vmem:[%s9 + $0x18] sm:$0xff]
  %190 = vset.pattern.permute.xlu0 0
  %191 = vperm.xlu0 %190, %v185
  %v192 = vpop.permute.xlu0 %191
  %195 = vset.pattern.permute.xlu0 0
  %196 = vperm.xlu0 %195, %v186
  %v197 = vpop.permute.xlu0 %196
  %200 = vset.pattern.permute.xlu0 0
  %201 = vperm.xlu0 %200, %v187
  %v202 = vpop.permute.xlu0 %201
  %205 = vset.pattern.permute.xlu0 0
  %206 = vperm.xlu0 %205, %v188
  %v207 = vpop.permute.xlu0 %206
  %v210 = vsel %vm99, %v181, 0
  %v213 = vsel %vm99, %v182, 0
  %v216 = vsel %vm99, %v183, 0
  %v219 = vsel %vm99, %v184, 0
  %221 = vmatpush.msra.mxu0 0.0
  %222 = vmatpush.msra.mxu0 0.0
  %223 = vmatpush.msra.mxu0 0.0
  %224 = vmatpush.msra.mxu0 0.0
  %225 = vmatpush.msra.mxu0 0.0
  %226 = vmatpush.msra.mxu0 0.0
  %227 = vmatpush.msra.mxu0 0.0
  %228 = vmatpush.msra.mxu0 0.0
  %229 = vmatpush.msra.mxu0 0.0
  %230 = vmatpush.msra.mxu0 0.0
  %231 = vmatpush.msra.mxu0 0.0
  %232 = vmatpush.msra.mxu0 0.0
  %233 = vmatpush.msra.mxu0 0.0
  %234 = vmatpush.msra.mxu0 0.0
  %235 = vmatpush.msra.mxu0 %v180
  %236 = vmatpush.msra.mxu0 %v179
  %237 = vmatmul.f32.gmra.mxu0 %v210
  %v238 = vpop.f32.mrf.mxu0
  %v239 = vadd.f32 %v192, %v238
  %240 = vmatmul.f32.gmra.mxu0 %v213
  %v241 = vpop.f32.mrf.mxu0
  %v242 = vadd.f32 %v197, %v241
  %243 = vmatmul.f32.gmra.mxu0 %v216
  %v244 = vpop.f32.mrf.mxu0
  %v245 = vadd.f32 %v202, %v244
  %246 = vmatmul.f32.gmra.mxu0 %v219
  %v247 = vpop.f32.mrf.mxu0
  %v248 = vadd.f32 %v207, %v247
  %249 = vdwg.mxu0
  %v250 = vmul.f32 %v239, 0.5
  %v251 = vmul.f32 %v242, 0.5
  %v252 = vmul.f32 %v245, 0.5
  %v253 = vmul.f32 %v248, 0.5
  %v254 = vtanh.pop %v250
  %v255 = vtanh.pop %v251
  %v256 = vtanh.pop %v252
  %v257 = vtanh.pop %v253
  %v258 = vmul.f32 %v254, 0.5
  %v259 = vmul.f32 %v255, 0.5
  %v260 = vmul.f32 %v256, 0.5
  %v261 = vmul.f32 %v257, 0.5
  %v262 = vadd.f32 %v258, 0.5
  %v263 = vadd.f32 %v259, 0.5
  %v264 = vadd.f32 %v260, 0.5
  %v265 = vadd.f32 %v261, 0.5
  %266 = vst.msk [vmem:[%s10] sm:$0xff] %vm149, %v262
  %267 = vst.msk [vmem:[%s10 + $0x8] sm:$0xff] %vm149, %v263
  %268 = vst.msk [vmem:[%s10 + $0x10] sm:$0xff] %vm149, %v264
  %269 = vst.msk [vmem:[%s10 + $0x18] sm:$0xff] %vm149, %v265
  %270 = vst.msk [vmem:[%s10 + $0x20] sm:$0xff] %vm149, %v124
  %271 = vst.msk [vmem:[%s10 + $0x28] sm:$0xff] %vm149, %v127
  // Predicated region
  $region42: #{tpu_custom_call.1} parent=0 // pred_check
    _
  $region43: #{tpu_custom_call.1} parent=0 // pred_check_branch
    %273 = sbr.rel (0) target = $region45
  $region44: #{tpu_custom_call.1} parent=0 // pred_region
    _
  $region45: #{tpu_custom_call.1} parent=0 // pred_fallthru
    _
  // Predicated region
  $region46: #{tpu_custom_call.1} parent=0 // pred_check
    _
  $region47: #{tpu_custom_call.1} parent=0 // pred_check_branch
    %275 = sbr.rel (0) target = $region49
  $region48: #{tpu_custom_call.1} parent=0 // pred_region
    _
  $region49: #{tpu_custom_call.1} parent=0 // pred_fallthru
    _

</llo_original>
